<compile_context>
chip_gen: v7x
topology: tpu7x:2x2x1
jax: 0.10.0
libtpu: 0.0.40
codegen_flags: <defaults>
</compile_context>

<pallas_src>
import functools

import jax
import jax.numpy as jnp
from jax.experimental import pallas as pl
from jax.experimental.pallas import tpu as pltpu

_LANE = 128
# VMEM budget for buffers that scale with the tile width T:
# 2 inputs x 2 pipeline buffers (native dtype) + f32 accumulator scratch.
_VMEM_BUDGET = 10 * 1024 * 1024
_VMEM_LIMIT = 32 * 1024 * 1024


def _round_up(x, m):
    return -(-x // m) * m


def _pick_tile(bc, b, hw, itemsize):
    """Largest 128-aligned lane-tile whose working set fits the VMEM budget."""
    bc_pad = _round_up(bc, 8)
    b_pad = _round_up(max(b, 1), 8)
    per_lane = 2 * 2 * bc_pad * itemsize + (bc_pad + b_pad) * 4
    t_budget = max(_LANE, (_VMEM_BUDGET // per_lane) // _LANE * _LANE)
    return int(min(t_budget, _round_up(hw, _LANE)))


def _rmse_partial_kernel(yhat_ref, y_ref, mse_ref, e_ref, mse_acc, e_acc, *,
                         batch, hw, tile):
    """One spatial tile of width `tile` lanes.

    Accumulates (f32, lane-shaped, resident across the grid):
      mse_acc : (B*C, tile) += (yhat - y)^2               (masked past hw)
      e_acc   : (B,   tile) += 0.5 * m_b*(u_b^2 + v_b^2)  (masked past hw)
    On the last grid step, reduces the accumulators into the tiny outputs:
      mse_ref : (1, 1)  total sum of squared error
      e_ref   : (B, 1)  per-batch kinetic energy of the prediction
    """
    t = pl.program_id(0)
    nt = pl.num_programs(0)

    @pl.when(t == 0)
    def _init():
        mse_acc[...] = jnp.zeros_like(mse_acc)
        e_acc[...] = jnp.zeros_like(e_acc)

    # Lane-validity mask for the (possibly ragged) last tile: global element
    # index t*tile + lane must be < hw.  The padding lanes of an edge block
    # hold unspecified data; jnp.where is a select, so NaN/Inf garbage there
    # cannot leak into the accumulators.
    lane = jax.lax.broadcasted_iota(jnp.int32, (1, tile), 1)
    valid = lane < (hw - t * tile)

    yhat = yhat_ref[...].astype(jnp.float32)            # (B*C, tile)
    y = y_ref[...].astype(jnp.float32)

    diff = yhat - y
    mse_acc[...] += jnp.where(valid, diff * diff, 0.0)

    # Kinetic energy of the prediction, per batch element.  Channels live at
    # rows 3b (u), 3b+1 (v), 3b+2 (m); reuse the already-loaded f32 value via
    # static sublane slices (no extra VMEM reads, no strided ref loads).
    for b in range(batch):
        u = yhat[3 * b: 3 * b + 1, :]
        v = yhat[3 * b + 1: 3 * b + 2, :]
        m = yhat[3 * b + 2: 3 * b + 3, :]
        e_b = jnp.where(valid, 0.5 * m * (u * u + v * v), 0.0)   # (1, tile)
        e_acc[pl.ds(b, 1), :] += e_b

    @pl.when(t == nt - 1)
    def _finalize():
        mse_ref[...] = jnp.sum(mse_acc[...], keepdims=True)        # (1, 1)
        e_ref[...] = jnp.sum(e_acc[...], axis=1, keepdims=True)    # (B, 1)


def rmse_loss_3ch(yhat, y, initial_energy, eps=1e-6, reg=1e-3,
                  max_tile_lanes=None):
    B, C, H, W = yhat.shape
    assert C == 3, "this Pallas kernel implements the 3-channel branch"
    HW = H * W
    BC = B * C
    n_total = B * C * HW

    # Lane-dense 2-D packing (free, contiguous reshape); keep native dtype.
    yhat2 = yhat.reshape(BC, HW)
    y2 = y.reshape(BC, HW)

    T = _pick_tile(BC, B, HW, jnp.dtype(yhat.dtype).itemsize)
    if max_tile_lanes is not None:  # test hook: force small multi-tile grids
        T = max(_LANE, min(T, _round_up(int(max_tile_lanes), _LANE)))
    NT = _round_up(HW, T) // T

    kernel = functools.partial(_rmse_partial_kernel, batch=B, hw=HW, tile=T)

    mse_part, e_part = pl.pallas_call(
        kernel,
        grid=(NT,),
        in_specs=[
            pl.BlockSpec((BC, T), lambda t: (0, t)),
            pl.BlockSpec((BC, T), lambda t: (0, t)),
        ],
        out_specs=[
            pl.BlockSpec((1, 1), lambda t: (0, 0)),
            pl.BlockSpec((B, 1), lambda t: (0, 0)),
        ],
        out_shape=[
            jax.ShapeDtypeStruct((1, 1), jnp.float32),
            jax.ShapeDtypeStruct((B, 1), jnp.float32),
        ],
        scratch_shapes=[
            pltpu.VMEM((BC, T), jnp.float32),
            pltpu.VMEM((B, T), jnp.float32),
        ],
        compiler_params=pltpu.CompilerParams(
            dimension_semantics=("arbitrary",),
            vmem_limit_bytes=_VMEM_LIMIT,
        ),
    )(yhat2, y2)

    # Tiny scalar epilogue (off the bandwidth-critical path).
    mse_full = mse_part[0, 0] / n_total
    energy = e_part[:, 0]                                          # (B,)
    mse_e = jnp.mean((energy - initial_energy.astype(jnp.float32)) ** 2)
    return jnp.sqrt(mse_full + eps + reg * mse_e)


class RMSELoss:
    """Mirrors the PyTorch RMSELoss __init__/forward (3-channel branch)."""

    def __init__(self, eps=1e-6, reg=1e-3, initial_state=None):
        self.eps = eps
        self.reg = reg
        self.num_channel = initial_state.shape[1]
        if self.num_channel == 3:
            # __init__-time setup (not the forward hot path) — plain JAX glue.
            u = initial_state[:, 0]
            v = initial_state[:, 1]
            mass = initial_state[:, 2]
            velocity = jnp.sqrt(u ** 2 + v ** 2)
            self.initial_energy = jnp.sum(mass * velocity ** 2 / 2, axis=(-2, -1))
        else:
            self.initial_mass = jnp.sum(initial_state)

    def __call__(self, yhat, y):
        if self.num_channel == 3:
            return rmse_loss_3ch(yhat, y, self.initial_energy, self.eps, self.reg)
        # TODO(synk): non-3-channel branch expects 5-D inputs (mass-conservation
        # term over dims (3, 4)); shapes are under-specified in the reference so
        # it is not implemented as a Pallas kernel here.
        raise NotImplementedError("non-3-channel branch not implemented")


def _reference_loss(yhat, y, initial_energy, eps, reg):
    mse_full = jnp.mean((yhat - y) ** 2)
    u, v, m = yhat[:, 0], yhat[:, 1], yhat[:, 2]
    vel = jnp.sqrt(u ** 2 + v ** 2)
    energy = jnp.sum(m * vel ** 2 / 2, axis=(-2, -1))
    mse_e = jnp.mean((energy - initial_energy) ** 2)
    return jnp.sqrt(mse_full + eps + reg * mse_e)


if __name__ == "__main__":
    # --- case 1: single tile (grid (1,)), 128-aligned spatial size ---
    k1, k2, k3 = jax.random.split(jax.random.PRNGKey(0), 3)
    B, C, H, W = 2, 3, 16, 16
    initial_state = jax.random.normal(k1, (B, C, H, W), dtype=jnp.float32)
    yhat = jax.random.normal(k2, (B, C, H, W), dtype=jnp.float32)
    y = jax.random.normal(k3, (B, C, H, W), dtype=jnp.float32)

    loss_mod = RMSELoss(eps=1e-6, reg=1e-3, initial_state=initial_state)
    loss = jax.block_until_ready(loss_mod(yhat, y))
    ref = _reference_loss(yhat, y, loss_mod.initial_energy, 1e-6, 1e-3)
    assert jnp.allclose(loss, ref, rtol=1e-4, atol=1e-5), (loss, ref)

    # --- case 2: forced 128-lane tiles -> multi-tile accumulation plus a
    #     ragged, in-kernel-masked tail (HW = 400, last tile has 16 valid) ---
    k4, k5, k6 = jax.random.split(jax.random.PRNGKey(1), 3)
    B2, H2, W2 = 2, 20, 20
    initial_state2 = jax.random.normal(k4, (B2, 3, H2, W2), dtype=jnp.float32)
    yhat2 = jax.random.normal(k5, (B2, 3, H2, W2), dtype=jnp.float32)
    y2 = jax.random.normal(k6, (B2, 3, H2, W2), dtype=jnp.float32)
    loss_mod2 = RMSELoss(eps=1e-6, reg=1e-3, initial_state=initial_state2)
    ie2 = loss_mod2.initial_energy
    loss2 = jax.block_until_ready(
        rmse_loss_3ch(yhat2, y2, ie2, 1e-6, 1e-3, max_tile_lanes=128))
    ref2 = _reference_loss(yhat2, y2, ie2, 1e-6, 1e-3)
    assert jnp.allclose(loss2, ref2, rtol=1e-4, atol=1e-5), (loss2, ref2)

    # --- case 3: odd batch (B*C = 9 rows) + non-128-multiple HW through the
    #     default auto-tiling path and the class wrapper ---
    k7, k8, k9 = jax.random.split(jax.random.PRNGKey(2), 3)
    B3, H3, W3 = 3, 17, 33
    initial_state3 = jax.random.normal(k7, (B3, 3, H3, W3), dtype=jnp.float32)
    yhat3 = jax.random.normal(k8, (B3, 3, H3, W3), dtype=jnp.float32)
    y3 = jax.random.normal(k9, (B3, 3, H3, W3), dtype=jnp.float32)
    loss_mod3 = RMSELoss(eps=1e-6, reg=1e-3, initial_state=initial_state3)
    loss3 = jax.block_until_ready(loss_mod3(yhat3, y3))
    ref3 = _reference_loss(yhat3, y3, loss_mod3.initial_energy, 1e-6, 1e-3)
    assert jnp.allclose(loss3, ref3, rtol=1e-4, atol=1e-5), (loss3, ref3)

    print("KERNEL_OK")
</pallas_src>

<mosaic_0001>
module attributes {stable_mosaic.version = 11 : i64} {
  func.func @_rmse_partial_kernel(%arg0: i32, %arg1: memref<6x256xf32, #tpu.memory_space<vmem>>, %arg2: memref<6x256xf32, #tpu.memory_space<vmem>>, %arg3: memref<1x1xf32, #tpu.memory_space<vmem>>, %arg4: memref<2x1xf32, #tpu.memory_space<vmem>>, %arg5: memref<6x256xf32, #tpu.memory_space<vmem>>, %arg6: memref<2x256xf32, #tpu.memory_space<vmem>>) attributes {dimension_semantics = [#tpu.dimension_semantics<arbitrary>], iteration_bounds = array<i64: 1>, scalar_prefetch = 0 : i64, scratch_operands = 2 : i64, tpu.core_type = #tpu.core_type<tc>, window_params = [{transform_indices = @transform_0, window_bounds = array<i64: 6, 256>}, {transform_indices = @transform_1, window_bounds = array<i64: 6, 256>}, {pipeline_mode = #tpu.pipeline_mode<synchronous>, transform_indices = @transform_2, window_bounds = array<i64: 1, 1>}, {pipeline_mode = #tpu.pipeline_mode<synchronous>, transform_indices = @transform_3, window_bounds = array<i64: 2, 1>}]} {
    %c0_i32 = arith.constant 0 : i32
    %0 = arith.cmpi eq, %arg0, %c0_i32 : i32
    %1 = arith.extui %0 : i1 to i32
    %c0_i32_0 = arith.constant 0 : i32
    %2 = arith.cmpi ne, %1, %c0_i32_0 : i32
    scf.if %2 {
      %cst_22 = arith.constant 0.000000e+00 : f32
      %50 = vector.broadcast %cst_22 : f32 to vector<6x256xf32>
      %c0_23 = arith.constant 0 : index
      %c0_24 = arith.constant 0 : index
      %51 = vector.load %arg5[%c0_23, %c0_24] : memref<6x256xf32, #tpu.memory_space<vmem>>, vector<6x256xf32>
      tpu.vector_store %arg5[%c0_23, %c0_24], %50 {strides = array<i32>} : memref<6x256xf32, #tpu.memory_space<vmem>>, vector<6x256xf32>,
      %cst_25 = arith.constant 0.000000e+00 : f32
      %52 = vector.broadcast %cst_25 : f32 to vector<2x256xf32>
      %c0_26 = arith.constant 0 : index
      %c0_27 = arith.constant 0 : index
      %53 = vector.load %arg6[%c0_26, %c0_27] : memref<2x256xf32, #tpu.memory_space<vmem>>, vector<2x256xf32>
      tpu.vector_store %arg6[%c0_26, %c0_27], %52 {strides = array<i32>} : memref<2x256xf32, #tpu.memory_space<vmem>>, vector<2x256xf32>,
    } else {
    }
    %3 = tpu.iota {dimensions = array<i32: 1>} : vector<1x256xi32>
    %c256_i32 = arith.constant 256 : i32
    %4 = arith.muli %arg0, %c256_i32 : i32
    %c256_i32_1 = arith.constant 256 : i32
    %5 = arith.subi %c256_i32_1, %4 : i32
    %6 = vector.broadcast %5 : i32 to vector<1x256xi32>
    %7 = arith.cmpi slt, %3, %6 : vector<1x256xi32>
    %c0 = arith.constant 0 : index
    %c0_2 = arith.constant 0 : index
    %8 = vector.load %arg1[%c0, %c0_2] : memref<6x256xf32, #tpu.memory_space<vmem>>, vector<6x256xf32>
    %c0_3 = arith.constant 0 : index
    %c0_4 = arith.constant 0 : index
    %9 = vector.load %arg2[%c0_3, %c0_4] : memref<6x256xf32, #tpu.memory_space<vmem>>, vector<6x256xf32>
    %10 = arith.subf %8, %9 : vector<6x256xf32>
    %c0_5 = arith.constant 0 : index
    %c0_6 = arith.constant 0 : index
    %11 = vector.load %arg5[%c0_5, %c0_6] : memref<6x256xf32, #tpu.memory_space<vmem>>, vector<6x256xf32>
    %12 = arith.mulf %10, %10 : vector<6x256xf32>
    %cst = arith.constant 0.000000e+00 : f32
    %13 = vector.shape_cast %7 : vector<1x256xi1> to vector<1x256xi1>
    %14 = vector.broadcast %13 : vector<1x256xi1> to vector<6x256xi1>
    %15 = vector.broadcast %cst : f32 to vector<6x256xf32>
    %16 = arith.select %14, %12, %15 : vector<6x256xi1>, vector<6x256xf32>
    %17 = arith.addf %11, %16 : vector<6x256xf32>
    %c0_7 = arith.constant 0 : index
    %c0_8 = arith.constant 0 : index
    %18 = vector.load %arg5[%c0_7, %c0_8] : memref<6x256xf32, #tpu.memory_space<vmem>>, vector<6x256xf32>
    tpu.vector_store %arg5[%c0_7, %c0_8], %17 {strides = array<i32>} : memref<6x256xf32, #tpu.memory_space<vmem>>, vector<6x256xf32>,
    %19 = vector.extract_strided_slice %8 {offsets = [0, 0], sizes = [1, 256], strides = [1, 1]} : vector<6x256xf32> to vector<1x256xf32>
    %20 = vector.extract_strided_slice %8 {offsets = [1, 0], sizes = [1, 256], strides = [1, 1]} : vector<6x256xf32> to vector<1x256xf32>
    %21 = vector.extract_strided_slice %8 {offsets = [2, 0], sizes = [1, 256], strides = [1, 1]} : vector<6x256xf32> to vector<1x256xf32>
    %cst_9 = arith.constant 5.000000e-01 : f32
    %22 = vector.broadcast %cst_9 : f32 to vector<1x256xf32>
    %23 = arith.mulf %22, %21 : vector<1x256xf32>
    %24 = arith.mulf %19, %19 : vector<1x256xf32>
    %25 = arith.mulf %20, %20 : vector<1x256xf32>
    %26 = arith.addf %24, %25 : vector<1x256xf32>
    %27 = arith.mulf %23, %26 : vector<1x256xf32>
    %cst_10 = arith.constant 0.000000e+00 : f32
    %28 = vector.broadcast %cst_10 : f32 to vector<1x256xf32>
    %29 = arith.select %7, %27, %28 : vector<1x256xi1>, vector<1x256xf32>
    %c0_11 = arith.constant 0 : index
    %c0_12 = arith.constant 0 : index
    %30 = vector.load %arg6[%c0_11, %c0_12] : memref<2x256xf32, #tpu.memory_space<vmem>>, vector<1x256xf32>
    %31 = arith.addf %30, %29 : vector<1x256xf32>
    %c0_13 = arith.constant 0 : index
    %c0_14 = arith.constant 0 : index
    %32 = vector.load %arg6[%c0_13, %c0_14] : memref<2x256xf32, #tpu.memory_space<vmem>>, vector<1x256xf32>
    tpu.vector_store %arg6[%c0_13, %c0_14], %31 {strides = array<i32>} : memref<2x256xf32, #tpu.memory_space<vmem>>, vector<1x256xf32>,
    %33 = vector.extract_strided_slice %8 {offsets = [3, 0], sizes = [1, 256], strides = [1, 1]} : vector<6x256xf32> to vector<1x256xf32>
    %34 = vector.extract_strided_slice %8 {offsets = [4, 0], sizes = [1, 256], strides = [1, 1]} : vector<6x256xf32> to vector<1x256xf32>
    %35 = vector.extract_strided_slice %8 {offsets = [5, 0], sizes = [1, 256], strides = [1, 1]} : vector<6x256xf32> to vector<1x256xf32>
    %cst_15 = arith.constant 5.000000e-01 : f32
    %36 = vector.broadcast %cst_15 : f32 to vector<1x256xf32>
    %37 = arith.mulf %36, %35 : vector<1x256xf32>
    %38 = arith.mulf %33, %33 : vector<1x256xf32>
    %39 = arith.mulf %34, %34 : vector<1x256xf32>
    %40 = arith.addf %38, %39 : vector<1x256xf32>
    %41 = arith.mulf %37, %40 : vector<1x256xf32>
    %cst_16 = arith.constant 0.000000e+00 : f32
    %42 = vector.broadcast %cst_16 : f32 to vector<1x256xf32>
    %43 = arith.select %7, %41, %42 : vector<1x256xi1>, vector<1x256xf32>
    %c1 = arith.constant 1 : index
    %c0_17 = arith.constant 0 : index
    %44 = vector.load %arg6[%c1, %c0_17] : memref<2x256xf32, #tpu.memory_space<vmem>>, vector<1x256xf32>
    %45 = arith.addf %44, %43 : vector<1x256xf32>
    %c1_18 = arith.constant 1 : index
    %c0_19 = arith.constant 0 : index
    %46 = vector.load %arg6[%c1_18, %c0_19] : memref<2x256xf32, #tpu.memory_space<vmem>>, vector<1x256xf32>
    tpu.vector_store %arg6[%c1_18, %c0_19], %45 {strides = array<i32>} : memref<2x256xf32, #tpu.memory_space<vmem>>, vector<1x256xf32>,
    %c0_i32_20 = arith.constant 0 : i32
    %47 = arith.cmpi eq, %arg0, %c0_i32_20 : i32
    %48 = arith.extui %47 : i1 to i32
    %c0_i32_21 = arith.constant 0 : i32
    %49 = arith.cmpi ne, %48, %c0_i32_21 : i32
    scf.if %49 {
      %c0_22 = arith.constant 0 : index
      %c0_23 = arith.constant 0 : index
      %50 = vector.load %arg5[%c0_22, %c0_23] : memref<6x256xf32, #tpu.memory_space<vmem>>, vector<6x256xf32>
      %51 = vector.shape_cast %50 : vector<6x256xf32> to vector<1x6x256xf32>
      %cst_24 = arith.constant dense<0.000000e+00> : vector<1xf32>
      %52 = vector.multi_reduction <add>, %51, %cst_24 [1, 2] : vector<1x6x256xf32> to vector<1xf32>
      %53 = vector.shape_cast %52 : vector<1xf32> to vector<1x1x1xf32>
      %54 = vector.extract %53[0, 0, 0] : f32 from vector<1x1x1xf32>
      %55 = vector.broadcast %54 : f32 to vector<1x1xf32>
      %c0_25 = arith.constant 0 : index
      %c0_26 = arith.constant 0 : index
      %56 = vector.load %arg3[%c0_25, %c0_26] : memref<1x1xf32, #tpu.memory_space<vmem>>, vector<1x1xf32>
      tpu.vector_store %arg3[%c0_25, %c0_26], %55 {strides = array<i32>} : memref<1x1xf32, #tpu.memory_space<vmem>>, vector<1x1xf32>,
      %c0_27 = arith.constant 0 : index
      %c0_28 = arith.constant 0 : index
      %57 = vector.load %arg6[%c0_27, %c0_28] : memref<2x256xf32, #tpu.memory_space<vmem>>, vector<2x256xf32>
      %cst_29 = arith.constant dense<0.000000e+00> : vector<2xf32>
      %58 = vector.multi_reduction <add>, %57, %cst_29 [1] : vector<2x256xf32> to vector<2xf32>
      %59 = vector.shape_cast %58 : vector<2xf32> to vector<2x1xf32>
      %c0_30 = arith.constant 0 : index
      %c0_31 = arith.constant 0 : index
      %60 = vector.load %arg4[%c0_30, %c0_31] : memref<2x1xf32, #tpu.memory_space<vmem>>, vector<2x1xf32>
      tpu.vector_store %arg4[%c0_30, %c0_31], %59 {strides = array<i32>} : memref<2x1xf32, #tpu.memory_space<vmem>>, vector<2x1xf32>,
    } else {
    }
    return
  }
  func.func @transform_0(%arg0: i32) -> (i32, i32) {
    %c0_i32 = arith.constant 0 : i32
    %c0_i32_0 = arith.constant 0 : i32
    return %c0_i32, %arg0 : i32, i32
  }
  func.func @transform_1(%arg0: i32) -> (i32, i32) {
    %c0_i32 = arith.constant 0 : i32
    %c0_i32_0 = arith.constant 0 : i32
    return %c0_i32, %arg0 : i32, i32
  }
  func.func @transform_2(%arg0: i32) -> (i32, i32) {
    %c0_i32 = arith.constant 0 : i32
    %c0_i32_0 = arith.constant 0 : i32
    %c0_i32_1 = arith.constant 0 : i32
    return %c0_i32, %c0_i32_0 : i32, i32
  }
  func.func @transform_3(%arg0: i32) -> (i32, i32) {
    %c0_i32 = arith.constant 0 : i32
    %c0_i32_0 = arith.constant 0 : i32
    %c0_i32_1 = arith.constant 0 : i32
    return %c0_i32, %c0_i32_0 : i32, i32
  }
}

</mosaic_0001>

<llo_original>
// kernel: tpu_custom_call.1
$region0: #{tpu_custom_call.1}
  #allocation0 [shape = 'u32[]', space=smem, size = 0x4, offset = 0x4, fixed_abs, tag = 'smem constant byte address 0x4 - core index']
  #allocation1 [shape = 'u32[144,128]{1,0:T(1,128)}', space=vmem, size = 0x12000, scoped, tag = 'internal scratch']
  #allocation2 [shape = 'f32[6,256]{1,0:T(8,128)}', space=vmem, size = 0x2000, scoped, tag = 'scratch operand']
  #allocation3 [shape = 'f32[2,256]{1,0:T(2,128)}', space=vmem, size = 0x800, scoped, tag = 'scratch operand']
  %s0 = inlined_call_operand.hbm [shape: f32[6,256], index: 0, kind: input, shape index: {}]
  %s1 = inlined_call_operand.hbm [shape: f32[6,256], index: 1, kind: input, shape index: {}]
  %s2 = inlined_call_operand.hbm [shape: f32[1,1], index: 2, kind: output, shape index: {0}]
  %s3 = inlined_call_operand.vmem [shape: f32[2,1], index: 3, kind: output, shape index: {1}]
  %4 = xla_tuple %s2, %s3
  %s5 = sld [smem:[#allocation0]]
  $region42: #{tpu_custom_call.1} parent=0
    _
  %s7 = ssub.s32 1, %s5
  %s8 = scalar_select 0, %s7, %s5
  $region1: #{tpu_custom_call.1} parent=0
    #allocation4 [shape = 'u8[8192]{0}', space=vmem, size = 0x2000, scoped, tag = 'input window, operand 0, single buffered']
    #allocation5 [shape = 's32[1]{0}', space=sflag, size = 0x4, scoped, tag = 'scoped memory for tpu_custom_call.1']
    #allocation6 [shape = 's32[1]{0}', space=sflag, size = 0x4, scoped, tag = 'scoped memory for tpu_custom_call.1']
    #allocation7 [shape = 'u8[8192]{0}', space=vmem, size = 0x2000, scoped, tag = 'input window, operand 1, single buffered']
    #allocation8 [shape = 's32[1]{0}', space=sflag, size = 0x4, scoped, tag = 'scoped memory for tpu_custom_call.1']
    #allocation9 [shape = 'u8[512]{0}', space=vmem, size = 0x400, scoped, tag = 'output window, operand 0, single buffered']
    %9 = vsyncpa [#allocation5], 0
    %10 = vsyncpa [#allocation8], 0
    %11 = vsyncpa [#allocation6], 0
    // Predicated region
    $region2: #{tpu_custom_call.1} parent=1 // pred_check
      _
    $region3: #{tpu_custom_call.1} parent=1 // pred_check_branch
      %13 = sbr.rel (0) target = $region5
    $region4: #{tpu_custom_call.1} parent=1 // pred_region
      %s15 = ssub.s32 256, 256
      %16 = vsyncadd [#allocation5], %s15
      %s18 = sshll.u32 [#allocation4], 4
      %s19 = int_to_ptr.vmem [resolvable:$true] %s18
      %21 = dma.hbm_to_vmem [thread:$0]  %s0, 256, %s19, [#allocation5]
    $region5: #{tpu_custom_call.1} parent=1 // pred_fallthru
      _
    // Predicated region
    $region6: #{tpu_custom_call.1} parent=1 // pred_check
      _
    $region7: #{tpu_custom_call.1} parent=1 // pred_check_branch
      %23 = sbr.rel (0) target = $region9
    $region8: #{tpu_custom_call.1} parent=1 // pred_region
      %s25 = ssub.s32 256, 256
      %26 = vsyncadd [#allocation8], %s25
      %s28 = sshll.u32 [#allocation7], 4
      %s29 = int_to_ptr.vmem [resolvable:$true] %s28
      %31 = dma.hbm_to_vmem [thread:$0]  %s1, 256, %s29, [#allocation8]
    $region9: #{tpu_custom_call.1} parent=1 // pred_fallthru
      _
    // Predicated region
    $region10: #{tpu_custom_call.1} parent=1 // pred_check
      _
    $region11: #{tpu_custom_call.1} parent=1 // pred_check_branch
      %33 = sbr.rel (0) target = $region13
    $region12: #{tpu_custom_call.1} parent=1 // pred_region
      %34 = dma.done [#allocation5], 256
    $region13: #{tpu_custom_call.1} parent=1 // pred_fallthru
      _
    // Predicated region
    $region14: #{tpu_custom_call.1} parent=1 // pred_check
      _
    $region15: #{tpu_custom_call.1} parent=1 // pred_check_branch
      %36 = sbr.rel (0) target = $region17
    $region16: #{tpu_custom_call.1} parent=1 // pred_region
      %37 = dma.done [#allocation8], 256
    $region17: #{tpu_custom_call.1} parent=1 // pred_fallthru
      _
    %p38 = scmp.eq.s32.totalorder 0, 0
    // Predicated region
    $region18: #{tpu_custom_call.1} parent=1 // pred_check
      %p39 = pneg %p38
    $region19: #{tpu_custom_call.1} parent=1 // pred_check_branch
      %41 = sbr.rel (%p39) target = $region21
    $region20: #{tpu_custom_call.1} parent=1 // pred_region
      %42 = vst [vmem:[#allocation2] sm:$0x3f] 0.0
      %43 = vst [vmem:[#allocation2 + $0x8] sm:$0x3f] 0.0
      %44 = vst [vmem:[#allocation3] sm:$0xf] 0.0
    $region21: #{tpu_custom_call.1} parent=1 // pred_fallthru
      _
    %v45 = vlaneseq
    %v46 = vand.u32 %v45, 127
    %v47 = vadd.s32 %v46, 128
    %s48 = smul.u32 0, 256
    %s49 = ssub.s32 256, %s48
    %v50 = vstv %s49
    %vm51 = vcmp.lt.s32.totalorder %v46, %v50
    %vm52 = vcmp.lt.s32.totalorder %v47, %v50
    %v53 = vld [vmem:[#allocation4] sm:$0x3f]
    %v54 = vld [vmem:[#allocation4 + $0x8] sm:$0x3f]
    %v55 = vld [vmem:[#allocation7] sm:$0x3f]
    %v56 = vld [vmem:[#allocation7 + $0x8] sm:$0x3f]
    %v57 = vsub.f32 %v53, %v55
    %v58 = vsub.f32 %v54, %v56
    %v59 = vld [vmem:[#allocation2] sm:$0x3f]
    %v60 = vld [vmem:[#allocation2 + $0x8] sm:$0x3f]
    %v61 = vmul.f32 %v57, %v57
    %v62 = vmul.f32 %v58, %v58
    %v63 = vsel %vm51, 1, 0
    %v64 = vsel %vm52, 1, 0
    %vm65 = vcmp.eq.s32.totalorder %v63, 1
    %vm66 = vcmp.eq.s32.totalorder %v64, 1
    %v67 = vsel %vm65, %v61, 0.0
    %v68 = vsel %vm66, %v62, 0.0
    %v69 = vadd.f32 %v59, %v67
    %v70 = vadd.f32 %v60, %v68
    %71 = vst [vmem:[#allocation2] sm:$0x3f] %v69
    %72 = vst [vmem:[#allocation2 + $0x8] sm:$0x3f] %v70
    %v73 = vmul.f32 %v53, 0.5
    %v74 = vmul.f32 %v54, 0.5
    %v75 = vmul.f32 %v53, %v53
    %v76 = vmul.f32 %v54, %v54
    %v79 = vrot.slane %v75, 1
    %v80 = vrot.slane %v76, 1
    %v83 = vadd.f32 %v75, %v79
    %v84 = vadd.f32 %v76, %v80
    %v87 = vrot.slane %v83, 6
    %v88 = vrot.slane %v84, 6
    %v91 = vmul.f32 %v73, %v87
    %v92 = vmul.f32 %v74, %v88
    %v93 = vsel %vm51, %v91, 0.0
    %v94 = vsel %vm52, %v92, 0.0
    %v95 = vld [vmem:[#allocation3] ss:$2 sm:$0x3]
    %v98 = vcombine.low %v93, %v94
    %v100 = vunpack.c.l.s4 1966171168
    %v101 = vunpack.c.0.s8 %v100
    %v102 = vlaneseq
    %v103 = vshrl.u32 %v102, 7
    %v104 = vsub.s32 %v101, %v103
    %v105 = vrot.slane %v98, %v104
    %v107 = vunpack.c.l.s4 1966171168
    %v108 = vunpack.c.0.s8 %v107
    %v109 = vlaneseq
    %v110 = vshrl.u32 %v109, 7
    %v111 = vsub.s32 %v108, %v110
    %v112 = vrot.slane %v105, %v111
    %v113 = vcombine.high %v112, %v112
    %v115 = vadd.f32 %v95, %v113
    %v116 = vlaneseq
    %vm117 = vcmp.ge.s32.totalorder %v116, 0
    %vm118 = vcmp.lt.s32.totalorder %v116, 256
    %vm119 = vmand %vm117, %vm118
    %120 = vst.msk [vmem:[#allocation3] ss:$2 sm:$0x3] %vm119, %v115
    %s121 = scalar_lea.vmem [#allocation3], 1
    %v122 = vld [vmem:[%s121] ss:$2 sm:$0x3]
    %v123 = vcombine.high %v93, %v94
    %v125 = vunpack.c.l.s4 1966171168
    %v126 = vunpack.c.0.s8 %v125
    %v127 = vlaneseq
    %v128 = vshrl.u32 %v127, 7
    %v129 = vsub.s32 %v126, %v128
    %v130 = vrot.slane %v123, %v129
    %v131 = vcombine.high %v130, %v130
    %v133 = vunpack.c.l.s4 1966171168
    %v134 = vunpack.c.0.s8 %v133
    %v135 = vlaneseq
    %v136 = vshrl.u32 %v135, 7
    %v137 = vsub.s32 %v134, %v136
    %v138 = vrot.slane %v131, %v137
    %v140 = vadd.f32 %v122, %v138
    %141 = vst.msk [vmem:[%s121] ss:$2 sm:$0x3] %vm119, %v140
    // Predicated region
    $region22: #{tpu_custom_call.1} parent=1 // pred_check
      %p142 = pneg %p38
    $region23: #{tpu_custom_call.1} parent=1 // pred_check_branch
      %144 = sbr.rel (%p142) target = $region25
    $region24: #{tpu_custom_call.1} parent=1 // pred_region
      %v145 = vld [vmem:[#allocation2] sm:$0x3f]
      %v146 = vld [vmem:[#allocation2 + $0x8] sm:$0x3f]
      %vm147 = vcmask 1045504
      %v148 = vsel %vm147, %v145, 0.0
      %v149 = vsel %vm147, %v146, 0.0
      %v150 = vadd.f32 %v148, %v149
      %151 = vadd.xlane.f32.xlu0 %v150
      %v152 = vpop.xlane.xlu0 %151
      %v153 = vrot.slane %v152, 4
      %v154 = vadd.f32 %v152, %v153
      %v155 = vrot.slane %v154, 2
      %v156 = vadd.f32 %v154, %v155
      %v157 = vrot.slane %v156, 1
      %v158 = vadd.f32 %v156, %v157
      %s159 = vtos %v158
      %v160 = vstv %s159
      %vm161 = vcmask 0
      %162 = vst.msk [vmem:[#allocation9] sm:$0x1] %vm161, %v160
      %v163 = vld [vmem:[#allocation3] sm:$0xf]
      %v166 = vunpack.c.l.s4 1983009808
      %v167 = vunpack.c.0.s8 %v166
      %v168 = vlaneseq
      %v169 = vshrl.u32 %v168, 7
      %v170 = vsub.s32 %v167, %v169
      %v171 = vrot.slane %v163, %v170
      %v172 = vcombine.high %v171, %v171
      %vm175 = vcmask 1041408
      %v176 = vsel %vm175, %v171, 0.0
      %v177 = vsel %vm175, %v172, 0.0
      %v178 = vadd.f32 %v176, %v177
      %179 = vadd.xlane.f32.xlu0 %v178
      %v180 = vpop.xlane.xlu0 %179
      %vm181 = vcmask 1024
      %182 = vst.msk [vmem:[%s3] sm:$0x3] %vm181, %v180
    $region25: #{tpu_custom_call.1} parent=1 // pred_fallthru
      _
    // Predicated region
    $region26: #{tpu_custom_call.1} parent=1 // pred_check
      _
    $region27: #{tpu_custom_call.1} parent=1 // pred_check_branch
      %184 = sbr.rel (0) target = $region29
    $region28: #{tpu_custom_call.1} parent=1 // pred_region
      %s186 = ssub.s32 16, 16
      %187 = vsyncadd [#allocation6], %s186
      %s189 = sshll.u32 [#allocation9], 4
      %s190 = int_to_ptr.vmem [resolvable:$true] %s189
      %192 = dma.vmem_to_hbm [thread:$0]  %s190, 16, %s2, [#allocation6]
    $region29: #{tpu_custom_call.1} parent=1 // pred_fallthru
      _
    // Predicated region
    $region30: #{tpu_custom_call.1} parent=1 // pred_check
      _
    $region31: #{tpu_custom_call.1} parent=1 // pred_check_branch
      %194 = sbr.rel (0) target = $region33
    $region32: #{tpu_custom_call.1} parent=1 // pred_region
      _
    $region33: #{tpu_custom_call.1} parent=1 // pred_fallthru
      _
    // Predicated region
    $region34: #{tpu_custom_call.1} parent=1 // pred_check
      _
    $region35: #{tpu_custom_call.1} parent=1 // pred_check_branch
      %196 = sbr.rel (0) target = $region37
    $region36: #{tpu_custom_call.1} parent=1 // pred_region
      %197 = dma.done [#allocation6], 16
    $region37: #{tpu_custom_call.1} parent=1 // pred_fallthru
      _
    // Predicated region
    $region38: #{tpu_custom_call.1} parent=1 // pred_check
      _
    $region39: #{tpu_custom_call.1} parent=1 // pred_check_branch
      %199 = sbr.rel (0) target = $region41
    $region40: #{tpu_custom_call.1} parent=1 // pred_region
      _
    $region41: #{tpu_custom_call.1} parent=1 // pred_fallthru
      _
    %200 = vsyncpa [#allocation5], 1
    %201 = vsyncpa [#allocation8], 1
    %202 = vsyncpa [#allocation6], 1

</llo_original>
